<compile_context>
chip_gen: v7x
topology: tpu7x:2x2x1
jax: 0.10.0
libtpu: 0.0.40
codegen_flags: <defaults>
</compile_context>

<pallas_src>
import functools

import jax
import jax.numpy as jnp
from jax.experimental import pallas as pl
from jax.experimental.pallas import tpu as pltpu


def _round_up(x: int, m: int) -> int:
    return ((x + m - 1) // m) * m


def _cdiv(a: int, b: int) -> int:
    return (a + b - 1) // b


# ---------------------------------------------------------------------------
# Kernel: one fused 2-layer MLP over the packed (block-diagonal) weights.
# ---------------------------------------------------------------------------
def _fused_mlp_kernel(x_ref, w1_ref, b1_ref, w2_ref, b2_ref, out_ref):
    x = x_ref[...]
    # Layer 1: (TB, F) @ (F, 256) -> (TB, 256), bias add + ReLU in f32.
    h = jnp.dot(x, w1_ref[...], preferred_element_type=jnp.float32) + b1_ref[...]
    h = jnp.maximum(h, 0.0)
    # Layer 2: (TB, 256) @ (256, 128) -> (TB, 128) = [latent_pi | latent_vf].
    y = jnp.dot(h, w2_ref[...], preferred_element_type=jnp.float32) + b2_ref[...]
    out_ref[...] = y.astype(out_ref.dtype)


# ---------------------------------------------------------------------------
# One-time weight packing (wrapper side).
# ---------------------------------------------------------------------------
def pack_params(params):
    """Packs per-branch Linear params into lane-aligned fused weights.

    Returns dict with:
      w1: (F, 2*hid_pad)            = [w1p | 0 | w1v | 0]
      b1: (1, 2*hid_pad)
      w2: (2*hid_pad, out_pad)      block-diagonal (w2p top-left, w2v bottom-right)
      b2: (1, out_pad)
    plus static pi_dim / vf_dim for consumer-side column indexing.
    """
    w1p, b1p, w2p, b2p = params["w1p"], params["b1p"], params["w2p"], params["b2p"]
    w1v, b1v, w2v, b2v = params["w1v"], params["b1v"], params["w2v"], params["b2v"]

    feat = w1p.shape[0]
    hid = w1p.shape[1]
    pi_dim = w2p.shape[1]
    vf_dim = w2v.shape[1]
    dtype = w1p.dtype

    hid_pad = _round_up(hid, 128)               # 100 -> 128 per branch
    hcat = 2 * hid_pad                          # 256
    out_pad = _round_up(pi_dim + vf_dim, 128)   # 64 + 64 -> 128

    w1 = jnp.zeros((feat, hcat), dtype)
    w1 = w1.at[:, :hid].set(w1p)
    w1 = w1.at[:, hid_pad:hid_pad + hid].set(w1v)

    b1 = jnp.zeros((1, hcat), dtype)
    b1 = b1.at[:, :hid].set(b1p)
    b1 = b1.at[:, hid_pad:hid_pad + hid].set(b1v)

    w2 = jnp.zeros((hcat, out_pad), dtype)
    w2 = w2.at[:hid, :pi_dim].set(w2p)
    w2 = w2.at[hid_pad:hid_pad + hid, pi_dim:pi_dim + vf_dim].set(w2v)

    b2 = jnp.zeros((1, out_pad), dtype)
    b2 = b2.at[:, :pi_dim].set(b2p)
    b2 = b2.at[:, pi_dim:pi_dim + vf_dim].set(b2v)

    return dict(w1=w1, b1=b1, w2=w2, b2=b2, pi_dim=pi_dim, vf_dim=vf_dim)


# ---------------------------------------------------------------------------
# Jitted hot path: batch grid, resident single-buffered weights, lane-dense
# (pb, 128) fused output slab.  NO splitting / row-trimming in here.
# ---------------------------------------------------------------------------
@functools.partial(jax.jit, static_argnames=("tile_b",))
def _forward_packed_slab(x, w1, b1, w2, b2, *, tile_b=2048):
    batch, feat = x.shape
    hcat = w1.shape[1]
    out_pad = w2.shape[1]
    itemsize = jnp.dtype(x.dtype).itemsize

    # ---- balanced batch tiling ------------------------------------------
    # n_tiles = cdiv(batch, tile_b); tb = round_up(cdiv(batch, n_tiles), 8):
    # pads at most 7 rows per tile (never an almost-whole extra tile).
    pb8 = _round_up(batch, 8)
    n_tiles = _cdiv(pb8, tile_b)
    # v7x has 2 TensorCores: make sure the "parallel" batch axis has >= 2
    # steps once the batch is big enough to be worth splitting.
    if n_tiles == 1 and pb8 >= 1024:
        n_tiles = 2
    tb = _round_up(_cdiv(pb8, n_tiles), 8)
    pb = n_tiles * tb
    if pb != batch:
        x = jnp.pad(x, ((0, pb - batch), (0, 0)))

    # ---- scheduler hint ---------------------------------------------------
    cost = pl.CostEstimate(
        flops=2 * pb * (feat * hcat + hcat * out_pad),
        transcendentals=0,
        bytes_accessed=(pb * feat + feat * hcat + hcat
                        + hcat * out_pad + out_pad + pb * out_pad) * itemsize,
    )

    # ---- explicit VMEM budget --------------------------------------------
    weight_bytes = (feat * hcat + hcat + hcat * out_pad + out_pad) * itemsize
    io_bytes = 2 * tb * (feat + out_pad) * itemsize      # double-buffered x + out tiles
    scratch_bytes = tb * hcat * 4                        # f32 hidden intermediate
    vmem_limit = max(16 << 20,
                     min(48 << 20,
                         _round_up(2 * (weight_bytes + io_bytes + scratch_bytes)
                                   + (1 << 20), 1 << 20)))

    # Resident (constant index_map) blocks never change -> single buffer.
    resident = dict(pipeline_mode=pl.Buffered(1))

    out = pl.pallas_call(
        _fused_mlp_kernel,
        out_shape=jax.ShapeDtypeStruct((pb, out_pad), x.dtype),
        grid_spec=pltpu.PrefetchScalarGridSpec(
            num_scalar_prefetch=0,
            grid=(n_tiles,),
            in_specs=[
                pl.BlockSpec((tb, feat), lambda i: (i, 0)),                   # x tile
                pl.BlockSpec((feat, hcat), lambda i: (0, 0), **resident),     # W1cat
                pl.BlockSpec((1, hcat), lambda i: (0, 0), **resident),        # b1cat
                pl.BlockSpec((hcat, out_pad), lambda i: (0, 0), **resident),  # W2cat
                pl.BlockSpec((1, out_pad), lambda i: (0, 0), **resident),     # b2cat
            ],
            out_specs=pl.BlockSpec((tb, out_pad), lambda i: (i, 0)),
        ),
        compiler_params=pltpu.CompilerParams(
            dimension_semantics=("parallel",),   # shard batch across TCs on v7x
            vmem_limit_bytes=int(vmem_limit),
        ),
        cost_estimate=cost,
    )(x, w1, b1, w2, b2)
    return out


def custom_network_forward_packed(x, packed, *, tile_b=2048):
    """Recommended API: returns the fused slab of shape (pb, 128) where
    columns [0:pi_dim) are latent_pi and [pi_dim:pi_dim+vf_dim) are latent_vf,
    and rows >= x.shape[0] are padding.  No extra HBM copies are made."""
    return _forward_packed_slab(
        x, packed["w1"], packed["b1"], packed["w2"], packed["b2"], tile_b=tile_b)


def custom_network_forward(x, packed, *, tile_b=2048):
    """Convenience API matching the PyTorch module: (latent_pi, latent_vf).
    The split happens OUTSIDE the jitted hot path (each slice is a copy in
    JAX); perf-sensitive consumers should use custom_network_forward_packed
    and index columns lazily."""
    slab = custom_network_forward_packed(x, packed, tile_b=tile_b)
    b = x.shape[0]
    pi, vf = packed["pi_dim"], packed["vf_dim"]
    return slab[:b, :pi], slab[:b, pi:pi + vf]


# ---------------------------------------------------------------------------
# Synthetic init matching the PyTorch module (Linear fan-in uniform).
# ---------------------------------------------------------------------------
def init_params(key, feature_dim, hidden_dim=100, pi_dim=64, vf_dim=64,
                dtype=jnp.float32):
    keys = jax.random.split(key, 8)

    def lin(kw, kb, fan_in, fan_out):
        bound = 1.0 / jnp.sqrt(jnp.float32(fan_in))
        w = jax.random.uniform(kw, (fan_in, fan_out), dtype, -bound, bound)
        b = jax.random.uniform(kb, (1, fan_out), dtype, -bound, bound)
        return w, b

    w1p, b1p = lin(keys[0], keys[1], feature_dim, hidden_dim)
    w2p, b2p = lin(keys[2], keys[3], hidden_dim, pi_dim)
    w1v, b1v = lin(keys[4], keys[5], feature_dim, hidden_dim)
    w2v, b2v = lin(keys[6], keys[7], feature_dim if False else feature_dim, hidden_dim)
    # (w1v above uses feature_dim fan-in; keep value-net layer-2 separate)
    w2v, b2v = lin(keys[6], keys[7], hidden_dim, vf_dim)
    return dict(w1p=w1p, b1p=b1p, w2p=w2p, b2p=b2p,
                w1v=w1v, b1v=b1v, w2v=w2v, b2v=b2v)


if __name__ == "__main__":
    key = jax.random.PRNGKey(0)
    k_param, k_x = jax.random.split(key)

    batch, feature_dim = 8, 32
    params = init_params(k_param, feature_dim)
    packed = pack_params(params)
    pi_dim, vf_dim = packed["pi_dim"], packed["vf_dim"]
    x = jax.random.normal(k_x, (batch, feature_dim), jnp.float32)

    # Pure-JAX reference of the original (unpacked) module math.
    def ref(xa, p):
        h_pi = jnp.maximum(xa @ p["w1p"] + p["b1p"], 0.0)
        pi = h_pi @ p["w2p"] + p["b2p"]
        h_vf = jnp.maximum(xa @ p["w1v"] + p["b1v"], 0.0)
        vf = h_vf @ p["w2v"] + p["b2v"]
        return pi, vf

    # Hot-path (packed slab) result.
    slab = custom_network_forward_packed(x, packed)
    jax.block_until_ready(slab)
    ref_pi, ref_vf = ref(x, params)
    assert slab.shape[1] == 128
    assert jnp.allclose(slab[:batch, :pi_dim], ref_pi, atol=1e-5, rtol=1e-5)
    assert jnp.allclose(slab[:batch, pi_dim:pi_dim + vf_dim], ref_vf,
                        atol=1e-5, rtol=1e-5)

    # Convenience split (module-equivalent API).
    latent_pi, latent_vf = custom_network_forward(x, packed)
    jax.block_until_ready((latent_pi, latent_vf))
    assert latent_pi.shape == (batch, 64) and latent_vf.shape == (batch, 64)
    assert jnp.allclose(latent_pi, ref_pi, atol=1e-5, rtol=1e-5)
    assert jnp.allclose(latent_vf, ref_vf, atol=1e-5, rtol=1e-5)

    # Exercise the multi-step grid + balanced-tail path (1064 rows -> 2 tiles
    # of 536 rows each; only 8 padded rows total).
    big_batch = 1024 + 40
    xb = jax.random.normal(jax.random.PRNGKey(1), (big_batch, feature_dim), jnp.float32)
    big_slab = custom_network_forward_packed(xb, packed)
    jax.block_until_ready(big_slab)
    rb_pi, rb_vf = ref(xb, params)
    assert jnp.allclose(big_slab[:big_batch, :pi_dim], rb_pi, atol=1e-4, rtol=1e-4)
    assert jnp.allclose(big_slab[:big_batch, pi_dim:pi_dim + vf_dim], rb_vf,
                        atol=1e-4, rtol=1e-4)

    # Odd small batch (sublane padding only).
    xo = jax.random.normal(jax.random.PRNGKey(2), (13, feature_dim), jnp.float32)
    op, ov = custom_network_forward(xo, packed)
    jax.block_until_ready((op, ov))
    ro_pi, ro_vf = ref(xo, params)
    assert jnp.allclose(op, ro_pi, atol=1e-5, rtol=1e-5)
    assert jnp.allclose(ov, ro_vf, atol=1e-5, rtol=1e-5)

    print("KERNEL_OK")
</pallas_src>

<mosaic_0001>
module attributes {stable_mosaic.version = 11 : i64} {
  func.func @_fused_mlp_kernel(%arg0: i32, %arg1: memref<8x32xf32, #tpu.memory_space<vmem>>, %arg2: memref<32x256xf32, #tpu.memory_space<vmem>>, %arg3: memref<1x256xf32, #tpu.memory_space<vmem>>, %arg4: memref<256x128xf32, #tpu.memory_space<vmem>>, %arg5: memref<1x128xf32, #tpu.memory_space<vmem>>, %arg6: memref<8x128xf32, #tpu.memory_space<vmem>>) attributes {dimension_semantics = [#tpu.dimension_semantics<parallel>], iteration_bounds = array<i64: 1>, scalar_prefetch = 0 : i64, scratch_operands = 0 : i64, tpu.core_type = #tpu.core_type<tc>, window_params = [{transform_indices = @transform_0, window_bounds = array<i64: 8, 32>}, {pipeline_mode = #tpu.pipeline_mode<synchronous>, transform_indices = @transform_1, window_bounds = array<i64: 32, 256>}, {pipeline_mode = #tpu.pipeline_mode<synchronous>, transform_indices = @transform_2, window_bounds = array<i64: 1, 256>}, {pipeline_mode = #tpu.pipeline_mode<synchronous>, transform_indices = @transform_3, window_bounds = array<i64: 256, 128>}, {pipeline_mode = #tpu.pipeline_mode<synchronous>, transform_indices = @transform_4, window_bounds = array<i64: 1, 128>}, {transform_indices = @transform_5, window_bounds = array<i64: 8, 128>}]} {
    %c0 = arith.constant 0 : index
    %c0_0 = arith.constant 0 : index
    %0 = vector.load %arg1[%c0, %c0_0] : memref<8x32xf32, #tpu.memory_space<vmem>>, vector<8x32xf32>
    %c0_1 = arith.constant 0 : index
    %c0_2 = arith.constant 0 : index
    %1 = vector.load %arg2[%c0_1, %c0_2] : memref<32x256xf32, #tpu.memory_space<vmem>>, vector<32x256xf32>
    %cst = arith.constant dense<0.000000e+00> : vector<8x256xf32>
    %2 = tpu.matmul %0, %1, %cst {dimension_numbers = #tpu.dot_dimension_numbers<[1], [0], [0], [1], [0, 0, 1, 1], [], []>} : vector<8x32xf32>, vector<32x256xf32>, vector<8x256xf32> -> vector<8x256xf32>
    %c0_3 = arith.constant 0 : index
    %c0_4 = arith.constant 0 : index
    %3 = vector.load %arg3[%c0_3, %c0_4] : memref<1x256xf32, #tpu.memory_space<vmem>>, vector<1x256xf32>
    %4 = vector.broadcast %3 : vector<1x256xf32> to vector<8x256xf32>
    %5 = arith.addf %2, %4 : vector<8x256xf32>
    %cst_5 = arith.constant 0.000000e+00 : f32
    %6 = vector.broadcast %cst_5 : f32 to vector<8x256xf32>
    %7 = arith.maximumf %5, %6 : vector<8x256xf32>
    %c0_6 = arith.constant 0 : index
    %c0_7 = arith.constant 0 : index
    %8 = vector.load %arg4[%c0_6, %c0_7] : memref<256x128xf32, #tpu.memory_space<vmem>>, vector<256x128xf32>
    %cst_8 = arith.constant dense<0.000000e+00> : vector<8x128xf32>
    %9 = tpu.matmul %7, %8, %cst_8 {dimension_numbers = #tpu.dot_dimension_numbers<[1], [0], [0], [1], [0, 0, 1, 1], [], []>} : vector<8x256xf32>, vector<256x128xf32>, vector<8x128xf32> -> vector<8x128xf32>
    %c0_9 = arith.constant 0 : index
    %c0_10 = arith.constant 0 : index
    %10 = vector.load %arg5[%c0_9, %c0_10] : memref<1x128xf32, #tpu.memory_space<vmem>>, vector<1x128xf32>
    %11 = vector.broadcast %10 : vector<1x128xf32> to vector<8x128xf32>
    %12 = arith.addf %9, %11 : vector<8x128xf32>
    %c0_11 = arith.constant 0 : index
    %c0_12 = arith.constant 0 : index
    %13 = vector.load %arg6[%c0_11, %c0_12] : memref<8x128xf32, #tpu.memory_space<vmem>>, vector<8x128xf32>
    tpu.vector_store %arg6[%c0_11, %c0_12], %12 {strides = array<i32>} : memref<8x128xf32, #tpu.memory_space<vmem>>, vector<8x128xf32>,
    return
  }
  func.func @transform_0(%arg0: i32) -> (i32, i32) {
    %c0_i32 = arith.constant 0 : i32
    %c0_i32_0 = arith.constant 0 : i32
    return %arg0, %c0_i32 : i32, i32
  }
  func.func @transform_1(%arg0: i32) -> (i32, i32) {
    %c0_i32 = arith.constant 0 : i32
    %c0_i32_0 = arith.constant 0 : i32
    %c0_i32_1 = arith.constant 0 : i32
    return %c0_i32, %c0_i32_0 : i32, i32
  }
  func.func @transform_2(%arg0: i32) -> (i32, i32) {
    %c0_i32 = arith.constant 0 : i32
    %c0_i32_0 = arith.constant 0 : i32
    %c0_i32_1 = arith.constant 0 : i32
    return %c0_i32, %c0_i32_0 : i32, i32
  }
  func.func @transform_3(%arg0: i32) -> (i32, i32) {
    %c0_i32 = arith.constant 0 : i32
    %c0_i32_0 = arith.constant 0 : i32
    %c0_i32_1 = arith.constant 0 : i32
    return %c0_i32, %c0_i32_0 : i32, i32
  }
  func.func @transform_4(%arg0: i32) -> (i32, i32) {
    %c0_i32 = arith.constant 0 : i32
    %c0_i32_0 = arith.constant 0 : i32
    %c0_i32_1 = arith.constant 0 : i32
    return %c0_i32, %c0_i32_0 : i32, i32
  }
  func.func @transform_5(%arg0: i32) -> (i32, i32) {
    %c0_i32 = arith.constant 0 : i32
    %c0_i32_0 = arith.constant 0 : i32
    return %arg0, %c0_i32 : i32, i32
  }
}

</mosaic_0001>

<llo_original>
// kernel: _forward_packed_slab.1
$region0: #{_forward_packed_slab.1}
  #allocation0 [shape = 'u32[]', space=smem, size = 0x4, offset = 0x4, fixed_abs, tag = 'smem constant byte address 0x4 - core index']
  #allocation1 [shape = 'u32[144,128]{1,0:T(1,128)}', space=vmem, size = 0x12000, scoped, tag = 'internal scratch']
  %s0 = inlined_call_operand.hbm [shape: f32[8,32], index: 0, kind: input, shape index: {}]
  %s1 = inlined_call_operand.hbm [shape: f32[32,256], index: 1, kind: input, shape index: {}]
  %s2 = inlined_call_operand.vmem [shape: f32[1,256], index: 2, kind: input, shape index: {}]
  %s3 = inlined_call_operand.hbm [shape: f32[256,128], index: 3, kind: input, shape index: {}]
  %s4 = inlined_call_operand.vmem [shape: f32[1,128], index: 4, kind: input, shape index: {}]
  %s5 = inlined_call_operand.hbm [shape: f32[8,128], index: 5, kind: output, shape index: {}]
  %s6 = sld [smem:[#allocation0]]
  $region42: #{_forward_packed_slab.1} parent=0
    _
  %s8 = ssub.s32 1, %s6
  %s9 = scalar_select 0, %s8, %s6
  $region1: #{_forward_packed_slab.1} parent=0
    #allocation2 [shape = 'u8[4096]{0}', space=vmem, size = 0x1000, scoped, tag = 'input window, operand 0, single buffered']
    #allocation3 [shape = 's32[1]{0}', space=sflag, size = 0x4, scoped, tag = 'scoped memory for _forward_packed_slab.1']
    #allocation4 [shape = 's32[1]{0}', space=sflag, size = 0x4, scoped, tag = 'scoped memory for _forward_packed_slab.1']
    #allocation5 [shape = 'u8[32768]{0}', space=vmem, size = 0x8000, scoped, tag = 'input window, operand 1, single buffered']
    #allocation6 [shape = 's32[1]{0}', space=sflag, size = 0x4, scoped, tag = 'scoped memory for _forward_packed_slab.1']
    #allocation7 [shape = 'u8[131072]{0}', space=vmem, size = 0x20000, scoped, tag = 'input window, operand 3, single buffered']
    #allocation8 [shape = 'u8[4096]{0}', space=vmem, size = 0x1000, scoped, tag = 'output window, operand 0, single buffered']
    %10 = vsyncpa [#allocation3], 0
    %11 = vsyncpa [#allocation6], 0
    %12 = vsyncpa [#allocation4], 0
    // Predicated region
    $region2: #{_forward_packed_slab.1} parent=1 // pred_check
      _
    $region3: #{_forward_packed_slab.1} parent=1 // pred_check_branch
      %14 = sbr.rel (0) target = $region5
    $region4: #{_forward_packed_slab.1} parent=1 // pred_region
      %s16 = ssub.s32 128, 128
      %17 = vsyncadd [#allocation3], %s16
      %s19 = sshll.u32 [#allocation2], 4
      %s20 = int_to_ptr.vmem [resolvable:$true] %s19
      %22 = dma.hbm_to_vmem [thread:$0]  %s0, 128, %s20, [#allocation3]
    $region5: #{_forward_packed_slab.1} parent=1 // pred_fallthru
      _
    // Predicated region
    $region6: #{_forward_packed_slab.1} parent=1 // pred_check
      _
    $region7: #{_forward_packed_slab.1} parent=1 // pred_check_branch
      %24 = sbr.rel (0) target = $region9
    $region8: #{_forward_packed_slab.1} parent=1 // pred_region
      %s26 = ssub.s32 1024, 1024
      %27 = vsyncadd [#allocation6], %s26
      %s28 = sshll.u32 [#allocation5], 4
      %s29 = int_to_ptr.vmem [resolvable:$true] %s28
      %34 = dma.hbm_to_vmem [thread:$0]  %s1, 1024, %s29, [#allocation6], 256, 256, 16
    $region9: #{_forward_packed_slab.1} parent=1 // pred_fallthru
      _
    // Predicated region
    $region10: #{_forward_packed_slab.1} parent=1 // pred_check
      _
    $region11: #{_forward_packed_slab.1} parent=1 // pred_check_branch
      %36 = sbr.rel (0) target = $region13
    $region12: #{_forward_packed_slab.1} parent=1 // pred_region
      _
    $region13: #{_forward_packed_slab.1} parent=1 // pred_fallthru
      _
    // Predicated region
    $region14: #{_forward_packed_slab.1} parent=1 // pred_check
      _
    $region15: #{_forward_packed_slab.1} parent=1 // pred_check_branch
      %38 = sbr.rel (0) target = $region17
    $region16: #{_forward_packed_slab.1} parent=1 // pred_region
      %s40 = ssub.s32 4096, 4096
      %41 = vsyncadd [#allocation6], %s40
      %s42 = sshll.u32 [#allocation7], 4
      %s43 = int_to_ptr.vmem [resolvable:$true] %s42
      %48 = dma.hbm_to_vmem [thread:$0]  %s3, 4096, %s43, [#allocation6], 128, 128, 8
    $region17: #{_forward_packed_slab.1} parent=1 // pred_fallthru
      _
    // Predicated region
    $region18: #{_forward_packed_slab.1} parent=1 // pred_check
      _
    $region19: #{_forward_packed_slab.1} parent=1 // pred_check_branch
      %50 = sbr.rel (0) target = $region21
    $region20: #{_forward_packed_slab.1} parent=1 // pred_region
      _
    $region21: #{_forward_packed_slab.1} parent=1 // pred_fallthru
      _
    // Predicated region
    $region22: #{_forward_packed_slab.1} parent=1 // pred_check
      _
    $region23: #{_forward_packed_slab.1} parent=1 // pred_check_branch
      %52 = sbr.rel (0) target = $region25
    $region24: #{_forward_packed_slab.1} parent=1 // pred_region
      %53 = dma.done [#allocation3], 128
    $region25: #{_forward_packed_slab.1} parent=1 // pred_fallthru
      _
    // Predicated region
    $region26: #{_forward_packed_slab.1} parent=1 // pred_check
      _
    $region27: #{_forward_packed_slab.1} parent=1 // pred_check_branch
      %55 = sbr.rel (0) target = $region29
    $region28: #{_forward_packed_slab.1} parent=1 // pred_region
      %56 = dma.done [#allocation6], 1024
    $region29: #{_forward_packed_slab.1} parent=1 // pred_fallthru
      _
    // Predicated region
    $region30: #{_forward_packed_slab.1} parent=1 // pred_check
      _
    $region31: #{_forward_packed_slab.1} parent=1 // pred_check_branch
      %58 = sbr.rel (0) target = $region33
    $region32: #{_forward_packed_slab.1} parent=1 // pred_region
      %59 = dma.done [#allocation6], 4096
    $region33: #{_forward_packed_slab.1} parent=1 // pred_fallthru
      _
    %v60 = vld [vmem:[#allocation2] sm:$0xff]
    %v61 = vld [vmem:[#allocation5] sm:$0xff]
    %v62 = vld [vmem:[#allocation5 + $0x8] sm:$0xff]
    %v63 = vld [vmem:[#allocation5 + $0x10] sm:$0xff]
    %v64 = vld [vmem:[#allocation5 + $0x18] sm:$0xff]
    %v65 = vld [vmem:[#allocation5 + $0x20] sm:$0xff]
    %v66 = vld [vmem:[#allocation5 + $0x28] sm:$0xff]
    %v67 = vld [vmem:[#allocation5 + $0x30] sm:$0xff]
    %v68 = vld [vmem:[#allocation5 + $0x38] sm:$0xff]
    %v69 = vld [vmem:[%s2] sm:$0x3]
    %v71 = vlaneseq
    %v72 = vshrl.u32 %v71, 7
    %v73 = vsub.s32 0, %v72
    %v74 = vrot.slane %v69, %v73
    %v75 = vlaneseq
    %v76 = vshrl.u32 %v75, 7
    %v77 = vsub.s32 1, %v76
    %v78 = vrot.slane %v69, %v77
    %vm81 = vcmask 261120
    %v83 = vsel %vm81, %v60, 0
    %85 = vmatprep.subr.mxu0 %v62
    %86 = vmatpush1.msra.mxu0 %v61
    %87 = vmatprep.subr.mxu0 %v64
    %88 = vmatpush1.msra.mxu0 %v63
    %89 = vmatprep.subr.mxu0 %v66
    %90 = vmatpush1.msra.mxu0 %v65
    %91 = vmatprep.subr.mxu0 %v68
    %92 = vmatpush1.msra.mxu0 %v67
    %93 = vmatprep.subr.mxu0 0.0
    %94 = vmatpush1.msra.mxu0 0.0
    %95 = vmatprep.subr.mxu0 0.0
    %96 = vmatpush1.msra.mxu0 0.0
    %97 = vmatprep.subr.mxu0 0.0
    %98 = vmatpush1.msra.mxu0 0.0
    %99 = vmatprep.subr.mxu0 0.0
    %100 = vmatpush1.msra.mxu0 0.0
    %101 = vmatprep.subr.mxu0 0.0
    %102 = vmatpush1.msra.mxu0 0.0
    %103 = vmatprep.subr.mxu0 0.0
    %104 = vmatpush1.msra.mxu0 0.0
    %105 = vmatprep.subr.mxu0 0.0
    %106 = vmatpush1.msra.mxu0 0.0
    %107 = vmatprep.subr.mxu0 0.0
    %108 = vmatpush1.msra.mxu0 0.0
    %109 = vmatprep.subr.mxu0 0.0
    %110 = vmatpush1.msra.mxu0 0.0
    %111 = vmatprep.subr.mxu0 0.0
    %112 = vmatpush1.msra.mxu0 0.0
    %113 = vmatprep.subr.mxu0 0.0
    %114 = vmatpush1.msra.mxu0 0.0
    %115 = vmatprep.subr.mxu0 0.0
    %116 = vmatpush1.msra.mxu0 0.0
    %117 = vmatprep.subr.mxu0 0.0
    %118 = vmatpush1.msra.mxu0 0.0
    %119 = vmatprep.subr.mxu0 0.0
    %120 = vmatpush1.msra.mxu0 0.0
    %121 = vmatprep.subr.mxu0 0.0
    %122 = vmatpush1.msra.mxu0 0.0
    %123 = vmatprep.subr.mxu0 0.0
    %124 = vmatpush1.msra.mxu0 0.0
    %125 = vmatprep.subr.mxu0 0.0
    %126 = vmatpush1.msra.mxu0 0.0
    %127 = vmatprep.subr.mxu0 0.0
    %128 = vmatpush1.msra.mxu0 0.0
    %129 = vmatprep.subr.mxu0 0.0
    %130 = vmatpush1.msra.mxu0 0.0
    %131 = vmatprep.subr.mxu0 0.0
    %132 = vmatpush1.msra.mxu0 0.0
    %133 = vmatprep.subr.mxu0 0.0
    %134 = vmatpush1.msra.mxu0 0.0
    %135 = vmatprep.subr.mxu0 0.0
    %136 = vmatpush1.msra.mxu0 0.0
    %137 = vmatprep.subr.mxu0 0.0
    %138 = vmatpush1.msra.mxu0 0.0
    %139 = vmatprep.subr.mxu0 0.0
    %140 = vmatpush1.msra.mxu0 0.0
    %141 = vmatprep.subr.mxu0 0.0
    %142 = vmatpush1.msra.mxu0 0.0
    %143 = vmatprep.subr.mxu0 0.0
    %144 = vmatpush1.msra.mxu0 0.0
    %145 = vmatprep.subr.mxu0 0.0
    %146 = vmatpush1.msra.mxu0 0.0
    %147 = vmatprep.subr.mxu0 0.0
    %148 = vmatpush1.msra.mxu0 0.0
    %149 = vmatprep.mubr.f32.mxu0 0.0
    %150 = vmatmul.mubr.f32.gmra.mrb[0].mxu0 %v83
    %v151 = vpop.f32.mrb[0].mxu0
    %v152 = vadd.f32 %v74, %v151
    %v153 = vpop.f32.mrb[0].mxu0
    %v154 = vadd.f32 %v78, %v153
    %155 = vdwg.mxu0
    %v156 = vmax.f32 %v152, 0.0
    %v157 = vmax.f32 %v154, 0.0
    %v158 = vld [vmem:[#allocation7] sm:$0xff]
    %v159 = vld [vmem:[#allocation7 + $0x8] sm:$0xff]
    %v160 = vld [vmem:[#allocation7 + $0x10] sm:$0xff]
    %v161 = vld [vmem:[#allocation7 + $0x18] sm:$0xff]
    %v162 = vld [vmem:[#allocation7 + $0x20] sm:$0xff]
    %v163 = vld [vmem:[#allocation7 + $0x28] sm:$0xff]
    %v164 = vld [vmem:[#allocation7 + $0x30] sm:$0xff]
    %v165 = vld [vmem:[#allocation7 + $0x38] sm:$0xff]
    %v166 = vld [vmem:[#allocation7 + $0x40] sm:$0xff]
    %v167 = vld [vmem:[#allocation7 + $0x48] sm:$0xff]
    %v168 = vld [vmem:[#allocation7 + $0x50] sm:$0xff]
    %v169 = vld [vmem:[#allocation7 + $0x58] sm:$0xff]
    %v170 = vld [vmem:[#allocation7 + $0x60] sm:$0xff]
    %v171 = vld [vmem:[#allocation7 + $0x68] sm:$0xff]
    %v172 = vld [vmem:[#allocation7 + $0x70] sm:$0xff]
    %v173 = vld [vmem:[#allocation7 + $0x78] sm:$0xff]
    %v174 = vld [vmem:[#allocation7 + $0x80] sm:$0xff]
    %v175 = vld [vmem:[#allocation7 + $0x88] sm:$0xff]
    %v176 = vld [vmem:[#allocation7 + $0x90] sm:$0xff]
    %v177 = vld [vmem:[#allocation7 + $0x98] sm:$0xff]
    %v178 = vld [vmem:[#allocation7 + $0xa0] sm:$0xff]
    %v179 = vld [vmem:[#allocation7 + $0xa8] sm:$0xff]
    %v180 = vld [vmem:[#allocation7 + $0xb0] sm:$0xff]
    %v181 = vld [vmem:[#allocation7 + $0xb8] sm:$0xff]
    %v182 = vld [vmem:[#allocation7 + $0xc0] sm:$0xff]
    %v183 = vld [vmem:[#allocation7 + $0xc8] sm:$0xff]
    %v184 = vld [vmem:[#allocation7 + $0xd0] sm:$0xff]
    %v185 = vld [vmem:[#allocation7 + $0xd8] sm:$0xff]
    %v186 = vld [vmem:[#allocation7 + $0xe0] sm:$0xff]
    %v187 = vld [vmem:[#allocation7 + $0xe8] sm:$0xff]
    %v188 = vld [vmem:[#allocation7 + $0xf0] sm:$0xff]
    %v189 = vld [vmem:[#allocation7 + $0xf8] sm:$0xff]
    %v190 = vld [vmem:[%s4] sm:$0x1]
    %v192 = vlaneseq
    %v193 = vshrl.u32 %v192, 7
    %v194 = vsub.s32 0, %v193
    %v195 = vrot.slane %v190, %v194
    %197 = vmatprep.subr.mxu0 0.0
    %198 = vmatpush1.msra.mxu0 %v158
    %199 = vmatprep.subr.mxu0 0.0
    %200 = vmatpush1.msra.mxu0 %v159
    %201 = vmatprep.subr.mxu0 0.0
    %202 = vmatpush1.msra.mxu0 %v160
    %203 = vmatprep.subr.mxu0 0.0
    %204 = vmatpush1.msra.mxu0 %v161
    %205 = vmatprep.subr.mxu0 0.0
    %206 = vmatpush1.msra.mxu0 %v162
    %207 = vmatprep.subr.mxu0 0.0
    %208 = vmatpush1.msra.mxu0 %v163
    %209 = vmatprep.subr.mxu0 0.0
    %210 = vmatpush1.msra.mxu0 %v164
    %211 = vmatprep.subr.mxu0 0.0
    %212 = vmatpush1.msra.mxu0 %v165
    %213 = vmatprep.subr.mxu0 0.0
    %214 = vmatpush1.msra.mxu0 %v166
    %215 = vmatprep.subr.mxu0 0.0
    %216 = vmatpush1.msra.mxu0 %v167
    %217 = vmatprep.subr.mxu0 0.0
    %218 = vmatpush1.msra.mxu0 %v168
    %219 = vmatprep.subr.mxu0 0.0
    %220 = vmatpush1.msra.mxu0 %v169
    %221 = vmatprep.subr.mxu0 0.0
    %222 = vmatpush1.msra.mxu0 %v170
    %223 = vmatprep.subr.mxu0 0.0
    %224 = vmatpush1.msra.mxu0 %v171
    %225 = vmatprep.subr.mxu0 0.0
    %226 = vmatpush1.msra.mxu0 %v172
    %227 = vmatprep.subr.mxu0 0.0
    %228 = vmatpush1.msra.mxu0 %v173
    %229 = vmatprep.subr.mxu0 0.0
    %230 = vmatpush1.msra.mxu0 %v174
    %231 = vmatprep.subr.mxu0 0.0
    %232 = vmatpush1.msra.mxu0 %v175
    %233 = vmatprep.subr.mxu0 0.0
    %234 = vmatpush1.msra.mxu0 %v176
    %235 = vmatprep.subr.mxu0 0.0
    %236 = vmatpush1.msra.mxu0 %v177
    %237 = vmatprep.subr.mxu0 0.0
    %238 = vmatpush1.msra.mxu0 %v178
    %239 = vmatprep.subr.mxu0 0.0
    %240 = vmatpush1.msra.mxu0 %v179
    %241 = vmatprep.subr.mxu0 0.0
    %242 = vmatpush1.msra.mxu0 %v180
    %243 = vmatprep.subr.mxu0 0.0
    %244 = vmatpush1.msra.mxu0 %v181
    %245 = vmatprep.subr.mxu0 0.0
    %246 = vmatpush1.msra.mxu0 %v182
    %247 = vmatprep.subr.mxu0 0.0
    %248 = vmatpush1.msra.mxu0 %v183
    %249 = vmatprep.subr.mxu0 0.0
    %250 = vmatpush1.msra.mxu0 %v184
    %251 = vmatprep.subr.mxu0 0.0
    %252 = vmatpush1.msra.mxu0 %v185
    %253 = vmatprep.subr.mxu0 0.0
    %254 = vmatpush1.msra.mxu0 %v186
    %255 = vmatprep.subr.mxu0 0.0
    %256 = vmatpush1.msra.mxu0 %v187
    %257 = vmatprep.subr.mxu0 0.0
    %258 = vmatpush1.msra.mxu0 %v188
    %259 = vmatprep.subr.mxu0 0.0
    %260 = vmatpush1.msra.mxu0 %v189
    %261 = vmatprep.mubr.f32.mxu0 %v157
    %262 = vmatmul.mubr.f32.gmra.mrb[0].mxu0 %v156
    %v263 = vpop.f32.mrb[0].mxu0
    %v264 = vadd.f32 %v195, %v263
    %v265 = vpop.f32.mrb[0].mxu0
    %266 = vdwg.mxu0
    %267 = vst [vmem:[#allocation8] sm:$0xff] %v264
    // Predicated region
    $region34: #{_forward_packed_slab.1} parent=1 // pred_check
      _
    $region35: #{_forward_packed_slab.1} parent=1 // pred_check_branch
      %269 = sbr.rel (0) target = $region37
    $region36: #{_forward_packed_slab.1} parent=1 // pred_region
      %s271 = ssub.s32 128, 128
      %272 = vsyncadd [#allocation4], %s271
      %s274 = sshll.u32 [#allocation8], 4
      %s275 = int_to_ptr.vmem [resolvable:$true] %s274
      %277 = dma.vmem_to_hbm [thread:$0]  %s275, 128, %s5, [#allocation4]
    $region37: #{_forward_packed_slab.1} parent=1 // pred_fallthru
      _
    // Predicated region
    $region38: #{_forward_packed_slab.1} parent=1 // pred_check
      _
    $region39: #{_forward_packed_slab.1} parent=1 // pred_check_branch
      %279 = sbr.rel (0) target = $region41
    $region40: #{_forward_packed_slab.1} parent=1 // pred_region
      %280 = dma.done [#allocation4], 128
    $region41: #{_forward_packed_slab.1} parent=1 // pred_fallthru
      _
    %281 = vsyncpa [#allocation3], 1
    %282 = vsyncpa [#allocation6], 1
    %283 = vsyncpa [#allocation4], 1

</llo_original>
